<compile_context>
chip_gen: v6e
topology: v6e:2x2x1
jax: 0.10.0
libtpu: 0.0.40
codegen_flags: <defaults>
</compile_context>

<pallas_src>
import jax
import jax.numpy as jnp
from jax.experimental import pallas as pl
from jax.experimental.pallas import tpu as pltpu


# ----------------------------- Pallas kernel -------------------------------

def _fused_gcn2_kernel(a_ref, d_ref, x_ref, w1_ref, b1_ref, w2_ref, b2_ref,
                       o_ref):
    """Both GCNConv layers in one VMEM-resident pass.

    a_ref : (Np, Np) bf16   A_hat = A + I (self-loops added, un-normalized)
    d_ref : (Np, 1)  f32    d^{-1/2}  (zero for padded nodes)
    x_ref : (Np, Fp) bf16   node features (feature dim zero-padded)
    w1_ref: (Fp, Hp) bf16 ; b1_ref: (1, Hp)  f32
    w2_ref: (Hp, Cp) bf16 ; b2_ref: (1, Cp)  f32  (classes zero-padded to Cp)
    o_ref : (Np, Cp) f32    logits slab (lane-dense store)
    """
    d = d_ref[...]                       # f32 scaling kept in full precision
    a_bf = a_ref[...]

    # ---- layer 1: h = relu(d * (A_hat @ (d * (X @ W1))) + b1) --------------
    xw1 = jnp.dot(x_ref[...], w1_ref[...], preferred_element_type=jnp.float32)
    sc1 = (d * xw1).astype(jnp.bfloat16)
    agg1 = jnp.dot(a_bf, sc1, preferred_element_type=jnp.float32)
    h = jnp.maximum(d * agg1 + b1_ref[...], 0.0)

    # F.dropout is identity in eval mode.
    # TODO(synk): training-mode dropout (p=0.5) not modeled.

    # ---- layer 2: out = d * (A_hat @ (d * (h @ W2))) + b2 ------------------
    xw2 = jnp.dot(h.astype(jnp.bfloat16), w2_ref[...],
                  preferred_element_type=jnp.float32)
    sc2 = (d * xw2).astype(jnp.bfloat16)
    agg2 = jnp.dot(a_bf, sc2, preferred_element_type=jnp.float32)
    o_ref[...] = (d * agg2 + b2_ref[...]).astype(o_ref.dtype)


# ------------------------------- JAX glue ----------------------------------

def _round_up(v, m):
    return ((v + m - 1) // m) * m


def gcn_gnnguard_forward(params, x, adj):
    """Forward of GCN_GNNGuard (eval, attention=False) on dense x / adj."""
    n, f = x.shape
    nhid = params["w1"].shape[1]
    nclass = params["w2"].shape[1]

    n_pad = _round_up(n, 128)       # MXU / lane-aligned node count
    f_pad = _round_up(f, 128)       # lane-aligned feature dim
    h_pad = _round_up(nhid, 128)    # lane-aligned hidden dim
    c_pad = _round_up(nclass, 128)  # lane-dense output store

    # gcn_norm prologue in f32: add remaining self-loops, compute d^{-1/2}.
    # Only raw A_hat + the small d vector go to the kernel; the normalized
    # N x N adjacency is never materialized in HBM.
    diag = jnp.diag(adj)
    a_hat = adj + jnp.diag(jnp.where(diag == 0.0, 1.0, 0.0))
    deg = a_hat.sum(axis=0)
    d_inv_sqrt = jnp.where(deg > 0.0, jax.lax.rsqrt(deg), 0.0)

    # Pad + cast MXU operands to bf16 (accumulation stays f32). Zero padding
    # is exact: padded nodes have d = 0 and zero adjacency rows/cols, padded
    # feature / hidden / class columns carry zero weights and biases.
    a_p = jnp.zeros((n_pad, n_pad), jnp.bfloat16).at[:n, :n].set(
        a_hat.astype(jnp.bfloat16))
    d_p = jnp.zeros((n_pad, 1), jnp.float32).at[:n, 0].set(d_inv_sqrt)
    x_p = jnp.zeros((n_pad, f_pad), jnp.bfloat16).at[:n, :f].set(
        x.astype(jnp.bfloat16))
    w1 = jnp.zeros((f_pad, h_pad), jnp.bfloat16).at[:f, :nhid].set(
        params["w1"].astype(jnp.bfloat16))
    b1 = jnp.zeros((1, h_pad), jnp.float32).at[0, :nhid].set(
        params["b1"].astype(jnp.float32))
    w2 = jnp.zeros((h_pad, c_pad), jnp.bfloat16).at[:nhid, :nclass].set(
        params["w2"].astype(jnp.bfloat16))
    b2 = jnp.zeros((1, c_pad), jnp.float32).at[0, :nclass].set(
        params["b2"].astype(jnp.float32))

    flops = (2 * n_pad * f_pad * h_pad + 2 * n_pad * n_pad * h_pad
             + 2 * n_pad * h_pad * c_pad + 2 * n_pad * n_pad * c_pad)
    operand_bytes = (a_p.size * 2 + x_p.size * 2 + d_p.size * 4
                     + w1.size * 2 + b1.size * 4 + w2.size * 2 + b2.size * 4
                     + n_pad * c_pad * 4)
    # Rough VMEM budget: operands + f32/bf16 intermediates; cap at 64 MiB
    # (v7x physical VMEM), floor at the 32 MiB default-ish scoped limit.
    interm_bytes = n_pad * h_pad * 4 * 4 + n_pad * c_pad * 4 * 3
    vmem_limit = int(min(max(operand_bytes + interm_bytes + (4 << 20),
                             32 << 20), 64 << 20))

    out = pl.pallas_call(
        _fused_gcn2_kernel,
        out_shape=jax.ShapeDtypeStruct((n_pad, c_pad), jnp.float32),
        compiler_params=pltpu.CompilerParams(vmem_limit_bytes=vmem_limit),
        cost_estimate=pl.CostEstimate(
            flops=flops, transcendentals=0, bytes_accessed=operand_bytes),
    )(a_p, d_p, x_p, w1, b1, w2, b2)

    # TODO(synk): for graphs where the (Np, Np) A_hat slab exceeds VMEM
    # (v7x: 64 MiB), fall back to per-layer row-tiled kernels with a K-tiled
    # "arbitrary" reduction axis over N and a "parallel" row axis.
    return out[:n, :nclass]


def init_params(key, nfeat, nhid, nclass):
    """Deterministic GCNConv-style glorot weights, zero biases."""
    k1, k2 = jax.random.split(key)

    def glorot(k, fan_in, fan_out):
        lim = jnp.sqrt(6.0 / (fan_in + fan_out))
        return jax.random.uniform(k, (fan_in, fan_out), jnp.float32, -lim, lim)

    return {
        "w1": glorot(k1, nfeat, nhid),
        "b1": jnp.zeros((nhid,), jnp.float32),
        "w2": glorot(k2, nhid, nclass),
        "b2": jnp.zeros((nclass,), jnp.float32),
    }


# --------------------------------- main -------------------------------------

if __name__ == "__main__":
    N, NFEAT, NHID, NCLASS = 128, 64, 32, 8

    key = jax.random.PRNGKey(0)
    kx, ka, kp = jax.random.split(key, 3)

    # Dense node features.
    x = jax.random.normal(kx, (N, NFEAT), jnp.float32)

    # Deterministic symmetric binary adjacency with no self-loops
    # (the sparse adj in the original module, densified).
    upper = (jax.random.uniform(ka, (N, N)) < 0.08).astype(jnp.float32)
    upper = jnp.triu(upper, k=1)
    adj = upper + upper.T

    params = init_params(kp, NFEAT, NHID, NCLASS)

    out = jax.jit(gcn_gnnguard_forward)(params, x, adj)
    out = jax.block_until_ready(out)

    assert out.shape == (N, NCLASS)
    assert jnp.all(jnp.isfinite(out))

    # Pure-JAX f32 reference of the same forward (loose tol: bf16 MXU inputs).
    diag = jnp.diag(adj)
    a_hat = adj + jnp.diag(jnp.where(diag == 0.0, 1.0, 0.0))
    deg = a_hat.sum(axis=0)
    d_is = jnp.where(deg > 0.0, jax.lax.rsqrt(deg), 0.0)
    a_norm = d_is[:, None] * a_hat * d_is[None, :]
    h_ref = jax.nn.relu(a_norm @ (x @ params["w1"]) + params["b1"])
    ref = a_norm @ (h_ref @ params["w2"]) + params["b2"]
    err = jnp.max(jnp.abs(out - ref))
    assert err < 0.03 + 0.05 * jnp.max(jnp.abs(ref)), f"max abs err {err}"

    print("KERNEL_OK")
</pallas_src>

<mosaic_0001>
module attributes {stable_mosaic.version = 11 : i64} {
  func.func @_fused_gcn2_kernel(%arg0: memref<128x128xbf16, #tpu.memory_space<vmem>>, %arg1: memref<128x1xf32, #tpu.memory_space<vmem>>, %arg2: memref<128x128xbf16, #tpu.memory_space<vmem>>, %arg3: memref<128x128xbf16, #tpu.memory_space<vmem>>, %arg4: memref<1x128xf32, #tpu.memory_space<vmem>>, %arg5: memref<128x128xbf16, #tpu.memory_space<vmem>>, %arg6: memref<1x128xf32, #tpu.memory_space<vmem>>, %arg7: memref<128x128xf32, #tpu.memory_space<vmem>>) attributes {dimension_semantics = [], scalar_prefetch = 0 : i64, scratch_operands = 0 : i64, tpu.core_type = #tpu.core_type<tc>} {
    %c0 = arith.constant 0 : index
    %c0_0 = arith.constant 0 : index
    %0 = vector.load %arg1[%c0, %c0_0] : memref<128x1xf32, #tpu.memory_space<vmem>>, vector<128x1xf32>
    %c0_1 = arith.constant 0 : index
    %c0_2 = arith.constant 0 : index
    %1 = vector.load %arg0[%c0_1, %c0_2] : memref<128x128xbf16, #tpu.memory_space<vmem>>, vector<128x128xbf16>
    %c0_3 = arith.constant 0 : index
    %c0_4 = arith.constant 0 : index
    %2 = vector.load %arg2[%c0_3, %c0_4] : memref<128x128xbf16, #tpu.memory_space<vmem>>, vector<128x128xbf16>
    %c0_5 = arith.constant 0 : index
    %c0_6 = arith.constant 0 : index
    %3 = vector.load %arg3[%c0_5, %c0_6] : memref<128x128xbf16, #tpu.memory_space<vmem>>, vector<128x128xbf16>
    %cst = arith.constant dense<0.000000e+00> : vector<128x128xf32>
    %4 = tpu.matmul %2, %3, %cst {dimension_numbers = #tpu.dot_dimension_numbers<[1], [0], [0], [1], [0, 0, 1, 1], [], []>} : vector<128x128xbf16>, vector<128x128xbf16>, vector<128x128xf32> -> vector<128x128xf32>
    %5 = vector.broadcast %0 : vector<128x1xf32> to vector<128x128xf32>
    %6 = arith.mulf %5, %4 : vector<128x128xf32>
    %7 = arith.truncf %6 : vector<128x128xf32> to vector<128x128xbf16>
    %cst_7 = arith.constant dense<0.000000e+00> : vector<128x128xf32>
    %8 = tpu.matmul %1, %7, %cst_7 {dimension_numbers = #tpu.dot_dimension_numbers<[1], [0], [0], [1], [0, 0, 1, 1], [], []>} : vector<128x128xbf16>, vector<128x128xbf16>, vector<128x128xf32> -> vector<128x128xf32>
    %9 = vector.broadcast %0 : vector<128x1xf32> to vector<128x128xf32>
    %10 = arith.mulf %9, %8 : vector<128x128xf32>
    %c0_8 = arith.constant 0 : index
    %c0_9 = arith.constant 0 : index
    %11 = vector.load %arg4[%c0_8, %c0_9] : memref<1x128xf32, #tpu.memory_space<vmem>>, vector<1x128xf32>
    %12 = vector.broadcast %11 : vector<1x128xf32> to vector<128x128xf32>
    %13 = arith.addf %10, %12 : vector<128x128xf32>
    %cst_10 = arith.constant 0.000000e+00 : f32
    %14 = vector.broadcast %cst_10 : f32 to vector<128x128xf32>
    %15 = arith.maximumf %13, %14 : vector<128x128xf32>
    %16 = arith.truncf %15 : vector<128x128xf32> to vector<128x128xbf16>
    %c0_11 = arith.constant 0 : index
    %c0_12 = arith.constant 0 : index
    %17 = vector.load %arg5[%c0_11, %c0_12] : memref<128x128xbf16, #tpu.memory_space<vmem>>, vector<128x128xbf16>
    %cst_13 = arith.constant dense<0.000000e+00> : vector<128x128xf32>
    %18 = tpu.matmul %16, %17, %cst_13 {dimension_numbers = #tpu.dot_dimension_numbers<[1], [0], [0], [1], [0, 0, 1, 1], [], []>} : vector<128x128xbf16>, vector<128x128xbf16>, vector<128x128xf32> -> vector<128x128xf32>
    %19 = vector.broadcast %0 : vector<128x1xf32> to vector<128x128xf32>
    %20 = arith.mulf %19, %18 : vector<128x128xf32>
    %21 = arith.truncf %20 : vector<128x128xf32> to vector<128x128xbf16>
    %cst_14 = arith.constant dense<0.000000e+00> : vector<128x128xf32>
    %22 = tpu.matmul %1, %21, %cst_14 {dimension_numbers = #tpu.dot_dimension_numbers<[1], [0], [0], [1], [0, 0, 1, 1], [], []>} : vector<128x128xbf16>, vector<128x128xbf16>, vector<128x128xf32> -> vector<128x128xf32>
    %23 = vector.broadcast %0 : vector<128x1xf32> to vector<128x128xf32>
    %24 = arith.mulf %23, %22 : vector<128x128xf32>
    %c0_15 = arith.constant 0 : index
    %c0_16 = arith.constant 0 : index
    %25 = vector.load %arg6[%c0_15, %c0_16] : memref<1x128xf32, #tpu.memory_space<vmem>>, vector<1x128xf32>
    %26 = vector.broadcast %25 : vector<1x128xf32> to vector<128x128xf32>
    %27 = arith.addf %24, %26 : vector<128x128xf32>
    %c0_17 = arith.constant 0 : index
    %c0_18 = arith.constant 0 : index
    %28 = vector.load %arg7[%c0_17, %c0_18] : memref<128x128xf32, #tpu.memory_space<vmem>>, vector<128x128xf32>
    tpu.vector_store %arg7[%c0_17, %c0_18], %27 {strides = array<i32>} : memref<128x128xf32, #tpu.memory_space<vmem>>, vector<128x128xf32>,
    return
  }
}

</mosaic_0001>

<llo_original>
// kernel: gcn_gnnguard_forward.1
$region0: #{gcn_gnnguard_forward.1}
  #allocation0 [shape = 'u32[]', space=smem, size = 0x4, offset = 0x4, fixed_abs, tag = 'smem constant byte address 0x4 - core index']
  #allocation1 [shape = 'u32[144,128]{1,0:T(1,128)}', space=vmem, size = 0x12000, scoped, tag = 'internal scratch']
  %s0 = inlined_call_operand.vmem [shape: bf16[128,128], index: 0, kind: input, shape index: {}]
  %s1 = inlined_call_operand.vmem [shape: f32[128,1], index: 1, kind: input, shape index: {}]
  %s2 = inlined_call_operand.vmem [shape: bf16[128,128], index: 2, kind: input, shape index: {}]
  %s3 = inlined_call_operand.vmem [shape: bf16[128,128], index: 3, kind: input, shape index: {}]
  %s4 = inlined_call_operand.vmem [shape: f32[1,128], index: 4, kind: input, shape index: {}]
  %s5 = inlined_call_operand.vmem [shape: bf16[128,128], index: 5, kind: input, shape index: {}]
  %s6 = inlined_call_operand.vmem [shape: f32[1,128], index: 6, kind: input, shape index: {}]
  %s7 = inlined_call_operand.vmem [shape: f32[128,128], index: 7, kind: output, shape index: {}]
  %s8 = sld [smem:[#allocation0]]
  $region38: #{gcn_gnnguard_forward.1} parent=0
    _
  %s10 = ssub.s32 1, %s8
  %s11 = scalar_select 0, %s10, %s8
  // Predicated region
  $region2: #{gcn_gnnguard_forward.1} parent=0 // pred_check
    _
  $region3: #{gcn_gnnguard_forward.1} parent=0 // pred_check_branch
    %13 = sbr.rel (0) target = $region5
  $region4: #{gcn_gnnguard_forward.1} parent=0 // pred_region
    _
  $region5: #{gcn_gnnguard_forward.1} parent=0 // pred_fallthru
    _
  // Predicated region
  $region6: #{gcn_gnnguard_forward.1} parent=0 // pred_check
    _
  $region7: #{gcn_gnnguard_forward.1} parent=0 // pred_check_branch
    %15 = sbr.rel (0) target = $region9
  $region8: #{gcn_gnnguard_forward.1} parent=0 // pred_region
    _
  $region9: #{gcn_gnnguard_forward.1} parent=0 // pred_fallthru
    _
  // Predicated region
  $region10: #{gcn_gnnguard_forward.1} parent=0 // pred_check
    _
  $region11: #{gcn_gnnguard_forward.1} parent=0 // pred_check_branch
    %17 = sbr.rel (0) target = $region13
  $region12: #{gcn_gnnguard_forward.1} parent=0 // pred_region
    _
  $region13: #{gcn_gnnguard_forward.1} parent=0 // pred_fallthru
    _
  // Predicated region
  $region14: #{gcn_gnnguard_forward.1} parent=0 // pred_check
    _
  $region15: #{gcn_gnnguard_forward.1} parent=0 // pred_check_branch
    %19 = sbr.rel (0) target = $region17
  $region16: #{gcn_gnnguard_forward.1} parent=0 // pred_region
    _
  $region17: #{gcn_gnnguard_forward.1} parent=0 // pred_fallthru
    _
  // Predicated region
  $region18: #{gcn_gnnguard_forward.1} parent=0 // pred_check
    _
  $region19: #{gcn_gnnguard_forward.1} parent=0 // pred_check_branch
    %21 = sbr.rel (0) target = $region21
  $region20: #{gcn_gnnguard_forward.1} parent=0 // pred_region
    _
  $region21: #{gcn_gnnguard_forward.1} parent=0 // pred_fallthru
    _
  // Predicated region
  $region22: #{gcn_gnnguard_forward.1} parent=0 // pred_check
    _
  $region23: #{gcn_gnnguard_forward.1} parent=0 // pred_check_branch
    %23 = sbr.rel (0) target = $region25
  $region24: #{gcn_gnnguard_forward.1} parent=0 // pred_region
    _
  $region25: #{gcn_gnnguard_forward.1} parent=0 // pred_fallthru
    _
  // Predicated region
  $region26: #{gcn_gnnguard_forward.1} parent=0 // pred_check
    _
  $region27: #{gcn_gnnguard_forward.1} parent=0 // pred_check_branch
    %25 = sbr.rel (0) target = $region29
  $region28: #{gcn_gnnguard_forward.1} parent=0 // pred_region
    _
  $region29: #{gcn_gnnguard_forward.1} parent=0 // pred_fallthru
    _
  %v27 = vld [vmem:[%s1] sm:$0xff]
  %v28 = vld [vmem:[%s1 + $0x8] sm:$0xff]
  %v29 = vld [vmem:[%s1 + $0x10] sm:$0xff]
  %v30 = vld [vmem:[%s1 + $0x18] sm:$0xff]
  %v31 = vld [vmem:[%s1 + $0x20] sm:$0xff]
  %v32 = vld [vmem:[%s1 + $0x28] sm:$0xff]
  %v33 = vld [vmem:[%s1 + $0x30] sm:$0xff]
  %v34 = vld [vmem:[%s1 + $0x38] sm:$0xff]
  %v35 = vld [vmem:[%s1 + $0x40] sm:$0xff]
  %v36 = vld [vmem:[%s1 + $0x48] sm:$0xff]
  %v37 = vld [vmem:[%s1 + $0x50] sm:$0xff]
  %v38 = vld [vmem:[%s1 + $0x58] sm:$0xff]
  %v39 = vld [vmem:[%s1 + $0x60] sm:$0xff]
  %v40 = vld [vmem:[%s1 + $0x68] sm:$0xff]
  %v41 = vld [vmem:[%s1 + $0x70] sm:$0xff]
  %v42 = vld [vmem:[%s1 + $0x78] sm:$0xff]
  %v43 = vld [vmem:[%s0] sm:$0xf]
  %v44 = vld [vmem:[%s0 + $0x4] sm:$0xf]
  %v45 = vld [vmem:[%s0 + $0x8] sm:$0xf]
  %v46 = vld [vmem:[%s0 + $0xc] sm:$0xf]
  %v47 = vld [vmem:[%s0 + $0x10] sm:$0xf]
  %v48 = vld [vmem:[%s0 + $0x14] sm:$0xf]
  %v49 = vld [vmem:[%s0 + $0x18] sm:$0xf]
  %v50 = vld [vmem:[%s0 + $0x1c] sm:$0xf]
  %v51 = vld [vmem:[%s0 + $0x20] sm:$0xf]
  %v52 = vld [vmem:[%s0 + $0x24] sm:$0xf]
  %v53 = vld [vmem:[%s0 + $0x28] sm:$0xf]
  %v54 = vld [vmem:[%s0 + $0x2c] sm:$0xf]
  %v55 = vld [vmem:[%s0 + $0x30] sm:$0xf]
  %v56 = vld [vmem:[%s0 + $0x34] sm:$0xf]
  %v57 = vld [vmem:[%s0 + $0x38] sm:$0xf]
  %v58 = vld [vmem:[%s0 + $0x3c] sm:$0xf]
  %v59 = vld [vmem:[%s2] sm:$0xf]
  %v60 = vld [vmem:[%s2 + $0x4] sm:$0xf]
  %v61 = vld [vmem:[%s2 + $0x8] sm:$0xf]
  %v62 = vld [vmem:[%s2 + $0xc] sm:$0xf]
  %v63 = vld [vmem:[%s2 + $0x10] sm:$0xf]
  %v64 = vld [vmem:[%s2 + $0x14] sm:$0xf]
  %v65 = vld [vmem:[%s2 + $0x18] sm:$0xf]
  %v66 = vld [vmem:[%s2 + $0x1c] sm:$0xf]
  %v67 = vld [vmem:[%s2 + $0x20] sm:$0xf]
  %v68 = vld [vmem:[%s2 + $0x24] sm:$0xf]
  %v69 = vld [vmem:[%s2 + $0x28] sm:$0xf]
  %v70 = vld [vmem:[%s2 + $0x2c] sm:$0xf]
  %v71 = vld [vmem:[%s2 + $0x30] sm:$0xf]
  %v72 = vld [vmem:[%s2 + $0x34] sm:$0xf]
  %v73 = vld [vmem:[%s2 + $0x38] sm:$0xf]
  %v74 = vld [vmem:[%s2 + $0x3c] sm:$0xf]
  %v75 = vld [vmem:[%s3] sm:$0xf]
  %v76 = vld [vmem:[%s3 + $0x4] sm:$0xf]
  %v77 = vld [vmem:[%s3 + $0x8] sm:$0xf]
  %v78 = vld [vmem:[%s3 + $0xc] sm:$0xf]
  %v79 = vld [vmem:[%s3 + $0x10] sm:$0xf]
  %v80 = vld [vmem:[%s3 + $0x14] sm:$0xf]
  %v81 = vld [vmem:[%s3 + $0x18] sm:$0xf]
  %v82 = vld [vmem:[%s3 + $0x1c] sm:$0xf]
  %v83 = vld [vmem:[%s3 + $0x20] sm:$0xf]
  %v84 = vld [vmem:[%s3 + $0x24] sm:$0xf]
  %v85 = vld [vmem:[%s3 + $0x28] sm:$0xf]
  %v86 = vld [vmem:[%s3 + $0x2c] sm:$0xf]
  %v87 = vld [vmem:[%s3 + $0x30] sm:$0xf]
  %v88 = vld [vmem:[%s3 + $0x34] sm:$0xf]
  %v89 = vld [vmem:[%s3 + $0x38] sm:$0xf]
  %v90 = vld [vmem:[%s3 + $0x3c] sm:$0xf]
  %v107 = vunpack.c.l.b16 %v59
  %v108 = vunpack.c.l.b16 %v60
  %v109 = vunpack.c.l.b16 %v61
  %v110 = vunpack.c.l.b16 %v62
  %v111 = vunpack.c.l.b16 %v63
  %v112 = vunpack.c.l.b16 %v64
  %v113 = vunpack.c.l.b16 %v65
  %v114 = vunpack.c.l.b16 %v66
  %v115 = vunpack.c.l.b16 %v67
  %v116 = vunpack.c.l.b16 %v68
  %v117 = vunpack.c.l.b16 %v69
  %v118 = vunpack.c.l.b16 %v70
  %v119 = vunpack.c.l.b16 %v71
  %v120 = vunpack.c.l.b16 %v72
  %v121 = vunpack.c.l.b16 %v73
  %v122 = vunpack.c.l.b16 %v74
  %v123 = vpack.c.b16 %v108, %v107
  %v124 = vpack.c.b16 %v110, %v109
  %v125 = vpack.c.b16 %v112, %v111
  %v126 = vpack.c.b16 %v114, %v113
  %v127 = vpack.c.b16 %v116, %v115
  %v128 = vpack.c.b16 %v118, %v117
  %v129 = vpack.c.b16 %v120, %v119
  %v130 = vpack.c.b16 %v122, %v121
  %v155 = vunpack.c.l.b16 %v75
  %v156 = vunpack.c.l.b16 %v76
  %v157 = vunpack.c.l.b16 %v77
  %v158 = vunpack.c.l.b16 %v78
  %v159 = vunpack.c.l.b16 %v79
  %v160 = vunpack.c.l.b16 %v80
  %v161 = vunpack.c.l.b16 %v81
  %v162 = vunpack.c.l.b16 %v82
  %v163 = vunpack.c.l.b16 %v83
  %v164 = vunpack.c.l.b16 %v84
  %v165 = vunpack.c.l.b16 %v85
  %v166 = vunpack.c.l.b16 %v86
  %v167 = vunpack.c.l.b16 %v87
  %v168 = vunpack.c.l.b16 %v88
  %v169 = vunpack.c.l.b16 %v89
  %v170 = vunpack.c.l.b16 %v90
  %v171 = vpack.c.b16 %v156, %v155
  %v172 = vpack.c.b16 %v158, %v157
  %v173 = vpack.c.b16 %v160, %v159
  %v174 = vpack.c.b16 %v162, %v161
  %v175 = vpack.c.b16 %v164, %v163
  %v176 = vpack.c.b16 %v166, %v165
  %v177 = vpack.c.b16 %v168, %v167
  %v178 = vpack.c.b16 %v170, %v169
  %187 = vmatprep.subr.bf16.mxu0 0
  %188 = vmatpush1.bf16.msra.mxu0 %v178
  %189 = vmatprep.subr.bf16.mxu0 0
  %190 = vmatpush1.bf16.msra.mxu0 %v177
  %191 = vmatprep.subr.bf16.mxu0 0
  %192 = vmatpush1.bf16.msra.mxu0 %v176
  %193 = vmatprep.subr.bf16.mxu0 0
  %194 = vmatpush1.bf16.msra.mxu0 %v175
  %195 = vmatprep.subr.bf16.mxu0 0
  %196 = vmatpush1.bf16.msra.mxu0 %v174
  %197 = vmatprep.subr.bf16.mxu0 0
  %198 = vmatpush1.bf16.msra.mxu0 %v173
  %199 = vmatprep.subr.bf16.mxu0 0
  %200 = vmatpush1.bf16.msra.mxu0 %v172
  %201 = vmatprep.subr.bf16.mxu0 0
  %202 = vmatpush1.bf16.msra.mxu0 %v171
  %203 = vmatprep.subr.bf16.mxu0 0
  %204 = vmatpush2.bf16.msra.mxu0 0
  %205 = vmatprep.subr.bf16.mxu0 0
  %206 = vmatpush2.bf16.msra.mxu0 0
  %207 = vmatprep.subr.bf16.mxu0 0
  %208 = vmatpush2.bf16.msra.mxu0 0
  %209 = vmatprep.subr.bf16.mxu0 0
  %210 = vmatpush2.bf16.msra.mxu0 0
  %211 = vmatprep.subr.bf16.mxu0 0
  %212 = vmatpush2.bf16.msra.mxu0 0
  %213 = vmatprep.subr.bf16.mxu0 0
  %214 = vmatpush2.bf16.msra.mxu0 0
  %215 = vmatprep.subr.bf16.mxu0 0
  %216 = vmatpush2.bf16.msra.mxu0 0
  %217 = vmatprep.subr.bf16.mxu0 0
  %218 = vmatpush2.bf16.msra.mxu0 0
  %219 = vmatprep.mubr.bf16.mxu0 0
  %220 = vmatmul.mubr.bf16.gmra.mxu0 %v123
  %v221 = vpop.f32.mrf.mxu0
  %v222 = vadd.f32 0.0, %v221
  %v223 = vpop.f32.mrf.mxu0
  %v224 = vpop.f32.mrf.mxu0
  %v225 = vadd.f32 0.0, %v224
  %v226 = vpop.f32.mrf.mxu0
  %227 = vmatprep.mubr.bf16.mxu0 0
  %228 = vmatmul.mubr.bf16.gmra.mxu0 %v124
  %v229 = vpop.f32.mrf.mxu0
  %v230 = vadd.f32 0.0, %v229
  %v231 = vpop.f32.mrf.mxu0
  %v232 = vpop.f32.mrf.mxu0
  %v233 = vadd.f32 0.0, %v232
  %v234 = vpop.f32.mrf.mxu0
  %235 = vmatprep.mubr.bf16.mxu0 0
  %236 = vmatmul.mubr.bf16.gmra.mxu0 %v125
  %v237 = vpop.f32.mrf.mxu0
  %v238 = vadd.f32 0.0, %v237
  %v239 = vpop.f32.mrf.mxu0
  %v240 = vpop.f32.mrf.mxu0
  %v241 = vadd.f32 0.0, %v240
  %v242 = vpop.f32.mrf.mxu0
  %243 = vmatprep.mubr.bf16.mxu0 0
  %244 = vmatmul.mubr.bf16.gmra.mxu0 %v126
  %v245 = vpop.f32.mrf.mxu0
  %v246 = vadd.f32 0.0, %v245
  %v247 = vpop.f32.mrf.mxu0
  %v248 = vpop.f32.mrf.mxu0
  %v249 = vadd.f32 0.0, %v248
  %v250 = vpop.f32.mrf.mxu0
  %251 = vmatprep.mubr.bf16.mxu0 0
  %252 = vmatmul.mubr.bf16.gmra.mxu0 %v127
  %v253 = vpop.f32.mrf.mxu0
  %v254 = vadd.f32 0.0, %v253
  %v255 = vpop.f32.mrf.mxu0
  %v256 = vpop.f32.mrf.mxu0
  %v257 = vadd.f32 0.0, %v256
  %v258 = vpop.f32.mrf.mxu0
  %259 = vmatprep.mubr.bf16.mxu0 0
  %260 = vmatmul.mubr.bf16.gmra.mxu0 %v128
  %v261 = vpop.f32.mrf.mxu0
  %v262 = vadd.f32 0.0, %v261
  %v263 = vpop.f32.mrf.mxu0
  %v264 = vpop.f32.mrf.mxu0
  %v265 = vadd.f32 0.0, %v264
  %v266 = vpop.f32.mrf.mxu0
  %267 = vmatprep.mubr.bf16.mxu0 0
  %268 = vmatmul.mubr.bf16.gmra.mxu0 %v129
  %v269 = vpop.f32.mrf.mxu0
  %v270 = vadd.f32 0.0, %v269
  %v271 = vpop.f32.mrf.mxu0
  %v272 = vpop.f32.mrf.mxu0
  %v273 = vadd.f32 0.0, %v272
  %v274 = vpop.f32.mrf.mxu0
  %275 = vmatprep.mubr.bf16.mxu0 0
  %276 = vmatmul.mubr.bf16.gmra.mxu0 %v130
  %v277 = vpop.f32.mrf.mxu0
  %v278 = vadd.f32 0.0, %v277
  %v279 = vpop.f32.mrf.mxu0
  %v280 = vpop.f32.mrf.mxu0
  %v281 = vadd.f32 0.0, %v280
  %v282 = vpop.f32.mrf.mxu0
  %283 = vdwg.mxu0
  %285 = vset.pattern.permute.xlu0 0
  %286 = vperm.xlu0 %285, %v27
  %v287 = vpop.permute.xlu0 %286
  %290 = vset.pattern.permute.xlu0 0
  %291 = vperm.xlu0 %290, %v28
  %v292 = vpop.permute.xlu0 %291
  %295 = vset.pattern.permute.xlu0 0
  %296 = vperm.xlu0 %295, %v29
  %v297 = vpop.permute.xlu0 %296
  %300 = vset.pattern.permute.xlu0 0
  %301 = vperm.xlu0 %300, %v30
  %v302 = vpop.permute.xlu0 %301
  %305 = vset.pattern.permute.xlu0 0
  %306 = vperm.xlu0 %305, %v31
  %v307 = vpop.permute.xlu0 %306
  %310 = vset.pattern.permute.xlu0 0
  %311 = vperm.xlu0 %310, %v32
  %v312 = vpop.permute.xlu0 %311
  %315 = vset.pattern.permute.xlu0 0
  %316 = vperm.xlu0 %315, %v33
  %v317 = vpop.permute.xlu0 %316
  %320 = vset.pattern.permute.xlu0 0
  %321 = vperm.xlu0 %320, %v34
  %v322 = vpop.permute.xlu0 %321
  %325 = vset.pattern.permute.xlu0 0
  %326 = vperm.xlu0 %325, %v35
  %v327 = vpop.permute.xlu0 %326
  %330 = vset.pattern.permute.xlu0 0
  %331 = vperm.xlu0 %330, %v36
  %v332 = vpop.permute.xlu0 %331
  %335 = vset.pattern.permute.xlu0 0
  %336 = vperm.xlu0 %335, %v37
  %v337 = vpop.permute.xlu0 %336
  %340 = vset.pattern.permute.xlu0 0
  %341 = vperm.xlu0 %340, %v38
  %v342 = vpop.permute.xlu0 %341
  %345 = vset.pattern.permute.xlu0 0
  %346 = vperm.xlu0 %345, %v39
  %v347 = vpop.permute.xlu0 %346
  %350 = vset.pattern.permute.xlu0 0
  %351 = vperm.xlu0 %350, %v40
  %v352 = vpop.permute.xlu0 %351
  %355 = vset.pattern.permute.xlu0 0
  %356 = vperm.xlu0 %355, %v41
  %v357 = vpop.permute.xlu0 %356
  %360 = vset.pattern.permute.xlu0 0
  %361 = vperm.xlu0 %360, %v42
  %v362 = vpop.permute.xlu0 %361
  %v364 = vmul.f32 %v287, %v222
  %v365 = vmul.f32 %v292, %v225
  %v366 = vmul.f32 %v297, %v230
  %v367 = vmul.f32 %v302, %v233
  %v368 = vmul.f32 %v307, %v238
  %v369 = vmul.f32 %v312, %v241
  %v370 = vmul.f32 %v317, %v246
  %v371 = vmul.f32 %v322, %v249
  %v372 = vmul.f32 %v327, %v254
  %v373 = vmul.f32 %v332, %v257
  %v374 = vmul.f32 %v337, %v262
  %v375 = vmul.f32 %v342, %v265
  %v376 = vmul.f32 %v347, %v270
  %v377 = vmul.f32 %v352, %v273
  %v378 = vmul.f32 %v357, %v278
  %v379 = vmul.f32 %v362, %v281
  %v380 = vpack.c.bf16 %v365, %v364
  %v381 = vpack.c.bf16 %v367, %v366
  %v382 = vpack.c.bf16 %v369, %v368
  %v383 = vpack.c.bf16 %v371, %v370
  %v384 = vpack.c.bf16 %v373, %v372
  %v385 = vpack.c.bf16 %v375, %v374
  %v386 = vpack.c.bf16 %v377, %v376
  %v387 = vpack.c.bf16 %v379, %v378
  %v404 = vunpack.c.l.b16 %v43
  %v405 = vunpack.c.l.b16 %v44
  %v406 = vunpack.c.l.b16 %v45
  %v407 = vunpack.c.l.b16 %v46
  %v408 = vunpack.c.l.b16 %v47
  %v409 = vunpack.c.l.b16 %v48
  %v410 = vunpack.c.l.b16 %v49
  %v411 = vunpack.c.l.b16 %v50
  %v412 = vunpack.c.l.b16 %v51
  %v413 = vunpack.c.l.b16 %v52
  %v414 = vunpack.c.l.b16 %v53
  %v415 = vunpack.c.l.b16 %v54
  %v416 = vunpack.c.l.b16 %v55
  %v417 = vunpack.c.l.b16 %v56
  %v418 = vunpack.c.l.b16 %v57
  %v419 = vunpack.c.l.b16 %v58
  %v420 = vpack.c.b16 %v405, %v404
  %v421 = vpack.c.b16 %v407, %v406
  %v422 = vpack.c.b16 %v409, %v408
  %v423 = vpack.c.b16 %v411, %v410
  %v424 = vpack.c.b16 %v413, %v412
  %v425 = vpack.c.b16 %v415, %v414
  %v426 = vpack.c.b16 %v417, %v416
  %v427 = vpack.c.b16 %v419, %v418
  %436 = vmatprep.subr.bf16.mxu0 0
  %437 = vmatpush1.bf16.msra.mxu0 %v387
  %438 = vmatprep.subr.bf16.mxu0 0
  %439 = vmatpush1.bf16.msra.mxu0 %v386
  %440 = vmatprep.subr.bf16.mxu0 0
  %441 = vmatpush1.bf16.msra.mxu0 %v385
  %442 = vmatprep.subr.bf16.mxu0 0
  %443 = vmatpush1.bf16.msra.mxu0 %v384
  %444 = vmatprep.subr.bf16.mxu0 0
  %445 = vmatpush1.bf16.msra.mxu0 %v383
  %446 = vmatprep.subr.bf16.mxu0 0
  %447 = vmatpush1.bf16.msra.mxu0 %v382
  %448 = vmatprep.subr.bf16.mxu0 0
  %449 = vmatpush1.bf16.msra.mxu0 %v381
  %450 = vmatprep.subr.bf16.mxu0 0
  %451 = vmatpush1.bf16.msra.mxu0 %v380
  %452 = vmatprep.subr.bf16.mxu0 0
  %453 = vmatpush2.bf16.msra.mxu0 0
  %454 = vmatprep.subr.bf16.mxu0 0
  %455 = vmatpush2.bf16.msra.mxu0 0
  %456 = vmatprep.subr.bf16.mxu0 0
  %457 = vmatpush2.bf16.msra.mxu0 0
  %458 = vmatprep.subr.bf16.mxu0 0
  %459 = vmatpush2.bf16.msra.mxu0 0
  %460 = vmatprep.subr.bf16.mxu0 0
  %461 = vmatpush2.bf16.msra.mxu0 0
  %462 = vmatprep.subr.bf16.mxu0 0
  %463 = vmatpush2.bf16.msra.mxu0 0
  %464 = vmatprep.subr.bf16.mxu0 0
  %465 = vmatpush2.bf16.msra.mxu0 0
  %466 = vmatprep.subr.bf16.mxu0 0
  %467 = vmatpush2.bf16.msra.mxu0 0
  %468 = vmatprep.mubr.bf16.mxu0 0
  %469 = vmatmul.mubr.bf16.gmra.mxu0 %v420
  %v470 = vpop.f32.mrf.mxu0
  %v471 = vadd.f32 0.0, %v470
  %v472 = vpop.f32.mrf.mxu0
  %v473 = vpop.f32.mrf.mxu0
  %v474 = vadd.f32 0.0, %v473
  %v475 = vpop.f32.mrf.mxu0
  %476 = vmatprep.mubr.bf16.mxu0 0
  %477 = vmatmul.mubr.bf16.gmra.mxu0 %v421
  %v478 = vpop.f32.mrf.mxu0
  %v479 = vadd.f32 0.0, %v478
  %v480 = vpop.f32.mrf.mxu0
  %v481 = vpop.f32.mrf.mxu0
  %v482 = vadd.f32 0.0, %v481
  %v483 = vpop.f32.mrf.mxu0
  %484 = vmatprep.mubr.bf16.mxu0 0
  %485 = vmatmul.mubr.bf16.gmra.mxu0 %v422
  %v486 = vpop.f32.mrf.mxu0
  %v487 = vadd.f32 0.0, %v486
  %v488 = vpop.f32.mrf.mxu0
  %v489 = vpop.f32.mrf.mxu0
  %v490 = vadd.f32 0.0, %v489
  %v491 = vpop.f32.mrf.mxu0
  %492 = vmatprep.mubr.bf16.mxu0 0
  %493 = vmatmul.mubr.bf16.gmra.mxu0 %v423
  %v494 = vpop.f32.mrf.mxu0
  %v495 = vadd.f32 0.0, %v494
  %v496 = vpop.f32.mrf.mxu0
  %v497 = vpop.f32.mrf.mxu0
  %v498 = vadd.f32 0.0, %v497
  %v499 = vpop.f32.mrf.mxu0
  %500 = vmatprep.mubr.bf16.mxu0 0
  %501 = vmatmul.mubr.bf16.gmra.mxu0 %v424
  %v502 = vpop.f32.mrf.mxu0
  %v503 = vadd.f32 0.0, %v502
  %v504 = vpop.f32.mrf.mxu0
  %v505 = vpop.f32.mrf.mxu0
  %v506 = vadd.f32 0.0, %v505
  %v507 = vpop.f32.mrf.mxu0
  %508 = vmatprep.mubr.bf16.mxu0 0
  %509 = vmatmul.mubr.bf16.gmra.mxu0 %v425
  %v510 = vpop.f32.mrf.mxu0
  %v511 = vadd.f32 0.0, %v510
  %v512 = vpop.f32.mrf.mxu0
  %v513 = vpop.f32.mrf.mxu0
  %v514 = vadd.f32 0.0, %v513
  %v515 = vpop.f32.mrf.mxu0
  %516 = vmatprep.mubr.bf16.mxu0 0
  %517 = vmatmul.mubr.bf16.gmra.mxu0 %v426
  %v518 = vpop.f32.mrf.mxu0
  %v519 = vadd.f32 0.0, %v518
  %v520 = vpop.f32.mrf.mxu0
  %v521 = vpop.f32.mrf.mxu0
  %v522 = vadd.f32 0.0, %v521
  %v523 = vpop.f32.mrf.mxu0
  %524 = vmatprep.mubr.bf16.mxu0 0
  %525 = vmatmul.mubr.bf16.gmra.mxu0 %v427
  %v526 = vpop.f32.mrf.mxu0
  %v527 = vadd.f32 0.0, %v526
  %v528 = vpop.f32.mrf.mxu0
  %v529 = vpop.f32.mrf.mxu0
  %v530 = vadd.f32 0.0, %v529
  %v531 = vpop.f32.mrf.mxu0
  %532 = vdwg.mxu0
  %v533 = vmul.f32 %v287, %v471
  %v534 = vmul.f32 %v292, %v474
  %v535 = vmul.f32 %v297, %v479
  %v536 = vmul.f32 %v302, %v482
  %v537 = vmul.f32 %v307, %v487
  %v538 = vmul.f32 %v312, %v490
  %v539 = vmul.f32 %v317, %v495
  %v540 = vmul.f32 %v322, %v498
  %v541 = vmul.f32 %v327, %v503
  %v542 = vmul.f32 %v332, %v506
  %v543 = vmul.f32 %v337, %v511
  %v544 = vmul.f32 %v342, %v514
  %v545 = vmul.f32 %v347, %v519
  %v546 = vmul.f32 %v352, %v522
  %v547 = vmul.f32 %v357, %v527
  %v548 = vmul.f32 %v362, %v530
  %v549 = vld [vmem:[%s4] sm:$0x1]
  %v551 = vlaneseq
  %v552 = vshrl.u32 %v551, 7
  %v553 = vsub.s32 0, %v552
  %v554 = vrot.slane %v549, %v553
  %v556 = vadd.f32 %v533, %v554
  %v557 = vadd.f32 %v534, %v554
  %v558 = vadd.f32 %v535, %v554
  %v559 = vadd.f32 %v536, %v554
  %v560 = vadd.f32 %v537, %v554
  %v561 = vadd.f32 %v538, %v554
  %v562 = vadd.f32 %v539, %v554
  %v563 = vadd.f32 %v540, %v554
  %v564 = vadd.f32 %v541, %v554
  %v565 = vadd.f32 %v542, %v554
  %v566 = vadd.f32 %v543, %v554
  %v567 = vadd.f32 %v544, %v554
  %v568 = vadd.f32 %v545, %v554
  %v569 = vadd.f32 %v546, %v554
  %v570 = vadd.f32 %v547, %v554
  %v571 = vadd.f32 %v548, %v554
  %v572 = vmax.f32 %v556, 0.0
  %v573 = vmax.f32 %v557, 0.0
  %v574 = vmax.f32 %v558, 0.0
  %v575 = vmax.f32 %v559, 0.0
  %v576 = vmax.f32 %v560, 0.0
  %v577 = vmax.f32 %v561, 0.0
  %v578 = vmax.f32 %v562, 0.0
  %v579 = vmax.f32 %v563, 0.0
  %v580 = vmax.f32 %v564, 0.0
  %v581 = vmax.f32 %v565, 0.0
  %v582 = vmax.f32 %v566, 0.0
  %v583 = vmax.f32 %v567, 0.0
  %v584 = vmax.f32 %v568, 0.0
  %v585 = vmax.f32 %v569, 0.0
  %v586 = vmax.f32 %v570, 0.0
  %v587 = vmax.f32 %v571, 0.0
  %v588 = vpack.c.bf16 %v573, %v572
  %v589 = vpack.c.bf16 %v575, %v574
  %v590 = vpack.c.bf16 %v577, %v576
  %v591 = vpack.c.bf16 %v579, %v578
  %v592 = vpack.c.bf16 %v581, %v580
  %v593 = vpack.c.bf16 %v583, %v582
  %v594 = vpack.c.bf16 %v585, %v584
  %v595 = vpack.c.bf16 %v587, %v586
  %v596 = vld [vmem:[%s5] sm:$0xf]
  %v597 = vld [vmem:[%s5 + $0x4] sm:$0xf]
  %v598 = vld [vmem:[%s5 + $0x8] sm:$0xf]
  %v599 = vld [vmem:[%s5 + $0xc] sm:$0xf]
  %v600 = vld [vmem:[%s5 + $0x10] sm:$0xf]
  %v601 = vld [vmem:[%s5 + $0x14] sm:$0xf]
  %v602 = vld [vmem:[%s5 + $0x18] sm:$0xf]
  %v603 = vld [vmem:[%s5 + $0x1c] sm:$0xf]
  %v604 = vld [vmem:[%s5 + $0x20] sm:$0xf]
  %v605 = vld [vmem:[%s5 + $0x24] sm:$0xf]
  %v606 = vld [vmem:[%s5 + $0x28] sm:$0xf]
  %v607 = vld [vmem:[%s5 + $0x2c] sm:$0xf]
  %v608 = vld [vmem:[%s5 + $0x30] sm:$0xf]
  %v609 = vld [vmem:[%s5 + $0x34] sm:$0xf]
  %v610 = vld [vmem:[%s5 + $0x38] sm:$0xf]
  %v611 = vld [vmem:[%s5 + $0x3c] sm:$0xf]
  %v628 = vunpack.c.l.b16 %v596
  %v629 = vunpack.c.l.b16 %v597
  %v630 = vunpack.c.l.b16 %v598
  %v631 = vunpack.c.l.b16 %v599
  %v632 = vunpack.c.l.b16 %v600
  %v633 = vunpack.c.l.b16 %v601
  %v634 = vunpack.c.l.b16 %v602
  %v635 = vunpack.c.l.b16 %v603
  %v636 = vunpack.c.l.b16 %v604
  %v637 = vunpack.c.l.b16 %v605
  %v638 = vunpack.c.l.b16 %v606
  %v639 = vunpack.c.l.b16 %v607
  %v640 = vunpack.c.l.b16 %v608
  %v641 = vunpack.c.l.b16 %v609
  %v642 = vunpack.c.l.b16 %v610
  %v643 = vunpack.c.l.b16 %v611
  %v644 = vpack.c.b16 %v629, %v628
  %v645 = vpack.c.b16 %v631, %v630
  %v646 = vpack.c.b16 %v633, %v632
  %v647 = vpack.c.b16 %v635, %v634
  %v648 = vpack.c.b16 %v637, %v636
  %v649 = vpack.c.b16 %v639, %v638
  %v650 = vpack.c.b16 %v641, %v640
  %v651 = vpack.c.b16 %v643, %v642
  %660 = vmatprep.subr.bf16.mxu0 0
  %661 = vmatpush1.bf16.msra.mxu0 %v651
  %662 = vmatprep.subr.bf16.mxu0 0
  %663 = vmatpush1.bf16.msra.mxu0 %v650
  %664 = vmatprep.subr.bf16.mxu0 0
  %665 = vmatpush1.bf16.msra.mxu0 %v649
  %666 = vmatprep.subr.bf16.mxu0 0
  %667 = vmatpush1.bf16.msra.mxu0 %v648
  %668 = vmatprep.subr.bf16.mxu0 0
  %669 = vmatpush1.bf16.msra.mxu0 %v647
  %670 = vmatprep.subr.bf16.mxu0 0
  %671 = vmatpush1.bf16.msra.mxu0 %v646
  %672 = vmatprep.subr.bf16.mxu0 0
  %673 = vmatpush1.bf16.msra.mxu0 %v645
  %674 = vmatprep.subr.bf16.mxu0 0
  %675 = vmatpush1.bf16.msra.mxu0 %v644
  %676 = vmatprep.subr.bf16.mxu0 0
  %677 = vmatpush2.bf16.msra.mxu0 0
  %678 = vmatprep.subr.bf16.mxu0 0
  %679 = vmatpush2.bf16.msra.mxu0 0
  %680 = vmatprep.subr.bf16.mxu0 0
  %681 = vmatpush2.bf16.msra.mxu0 0
  %682 = vmatprep.subr.bf16.mxu0 0
  %683 = vmatpush2.bf16.msra.mxu0 0
  %684 = vmatprep.subr.bf16.mxu0 0
  %685 = vmatpush2.bf16.msra.mxu0 0
  %686 = vmatprep.subr.bf16.mxu0 0
  %687 = vmatpush2.bf16.msra.mxu0 0
  %688 = vmatprep.subr.bf16.mxu0 0
  %689 = vmatpush2.bf16.msra.mxu0 0
  %690 = vmatprep.subr.bf16.mxu0 0
  %691 = vmatpush2.bf16.msra.mxu0 0
  %692 = vmatprep.mubr.bf16.mxu0 0
  %693 = vmatmul.mubr.bf16.gmra.mxu0 %v588
  %v694 = vpop.f32.mrf.mxu0
  %v695 = vadd.f32 0.0, %v694
  %v696 = vpop.f32.mrf.mxu0
  %v697 = vpop.f32.mrf.mxu0
  %v698 = vadd.f32 0.0, %v697
  %v699 = vpop.f32.mrf.mxu0
  %700 = vmatprep.mubr.bf16.mxu0 0
  %701 = vmatmul.mubr.bf16.gmra.mxu0 %v589
  %v702 = vpop.f32.mrf.mxu0
  %v703 = vadd.f32 0.0, %v702
  %v704 = vpop.f32.mrf.mxu0
  %v705 = vpop.f32.mrf.mxu0
  %v706 = vadd.f32 0.0, %v705
  %v707 = vpop.f32.mrf.mxu0
  %708 = vmatprep.mubr.bf16.mxu0 0
  %709 = vmatmul.mubr.bf16.gmra.mxu0 %v590
  %v710 = vpop.f32.mrf.mxu0
  %v711 = vadd.f32 0.0, %v710
  %v712 = vpop.f32.mrf.mxu0
  %v713 = vpop.f32.mrf.mxu0
  %v714 = vadd.f32 0.0, %v713
  %v715 = vpop.f32.mrf.mxu0
  %716 = vmatprep.mubr.bf16.mxu0 0
  %717 = vmatmul.mubr.bf16.gmra.mxu0 %v591
  %v718 = vpop.f32.mrf.mxu0
  %v719 = vadd.f32 0.0, %v718
  %v720 = vpop.f32.mrf.mxu0
  %v721 = vpop.f32.mrf.mxu0
  %v722 = vadd.f32 0.0, %v721
  %v723 = vpop.f32.mrf.mxu0
  %724 = vmatprep.mubr.bf16.mxu0 0
  %725 = vmatmul.mubr.bf16.gmra.mxu0 %v592
  %v726 = vpop.f32.mrf.mxu0
  %v727 = vadd.f32 0.0, %v726
  %v728 = vpop.f32.mrf.mxu0
  %v729 = vpop.f32.mrf.mxu0
  %v730 = vadd.f32 0.0, %v729
  %v731 = vpop.f32.mrf.mxu0
  %732 = vmatprep.mubr.bf16.mxu0 0
  %733 = vmatmul.mubr.bf16.gmra.mxu0 %v593
  %v734 = vpop.f32.mrf.mxu0
  %v735 = vadd.f32 0.0, %v734
  %v736 = vpop.f32.mrf.mxu0
  %v737 = vpop.f32.mrf.mxu0
  %v738 = vadd.f32 0.0, %v737
  %v739 = vpop.f32.mrf.mxu0
  %740 = vmatprep.mubr.bf16.mxu0 0
  %741 = vmatmul.mubr.bf16.gmra.mxu0 %v594
  %v742 = vpop.f32.mrf.mxu0
  %v743 = vadd.f32 0.0, %v742
  %v744 = vpop.f32.mrf.mxu0
  %v745 = vpop.f32.mrf.mxu0
  %v746 = vadd.f32 0.0, %v745
  %v747 = vpop.f32.mrf.mxu0
  %748 = vmatprep.mubr.bf16.mxu0 0
  %749 = vmatmul.mubr.bf16.gmra.mxu0 %v595
  %v750 = vpop.f32.mrf.mxu0
  %v751 = vadd.f32 0.0, %v750
  %v752 = vpop.f32.mrf.mxu0
  %v753 = vpop.f32.mrf.mxu0
  %v754 = vadd.f32 0.0, %v753
  %v755 = vpop.f32.mrf.mxu0
  %756 = vdwg.mxu0
  %v757 = vmul.f32 %v287, %v695
  %v758 = vmul.f32 %v292, %v698
  %v759 = vmul.f32 %v297, %v703
  %v760 = vmul.f32 %v302, %v706
  %v761 = vmul.f32 %v307, %v711
  %v762 = vmul.f32 %v312, %v714
  %v763 = vmul.f32 %v317, %v719
  %v764 = vmul.f32 %v322, %v722
  %v765 = vmul.f32 %v327, %v727
  %v766 = vmul.f32 %v332, %v730
  %v767 = vmul.f32 %v337, %v735
  %v768 = vmul.f32 %v342, %v738
  %v769 = vmul.f32 %v347, %v743
  %v770 = vmul.f32 %v352, %v746
  %v771 = vmul.f32 %v357, %v751
  %v772 = vmul.f32 %v362, %v754
  %v773 = vpack.c.bf16 %v758, %v757
  %v774 = vpack.c.bf16 %v760, %v759
  %v775 = vpack.c.bf16 %v762, %v761
  %v776 = vpack.c.bf16 %v764, %v763
  %v777 = vpack.c.bf16 %v766, %v765
  %v778 = vpack.c.bf16 %v768, %v767
  %v779 = vpack.c.bf16 %v770, %v769
  %v780 = vpack.c.bf16 %v772, %v771
  %781 = vmatprep.subr.bf16.mxu0 0
  %782 = vmatpush1.bf16.msra.mxu0 %v780
  %783 = vmatprep.subr.bf16.mxu0 0
  %784 = vmatpush1.bf16.msra.mxu0 %v779
  %785 = vmatprep.subr.bf16.mxu0 0
  %786 = vmatpush1.bf16.msra.mxu0 %v778
  %787 = vmatprep.subr.bf16.mxu0 0
  %788 = vmatpush1.bf16.msra.mxu0 %v777
  %789 = vmatprep.subr.bf16.mxu0 0
  %790 = vmatpush1.bf16.msra.mxu0 %v776
  %791 = vmatprep.subr.bf16.mxu0 0
  %792 = vmatpush1.bf16.msra.mxu0 %v775
  %793 = vmatprep.subr.bf16.mxu0 0
  %794 = vmatpush1.bf16.msra.mxu0 %v774
  %795 = vmatprep.subr.bf16.mxu0 0
  %796 = vmatpush1.bf16.msra.mxu0 %v773
  %797 = vmatprep.subr.bf16.mxu0 0
  %798 = vmatpush2.bf16.msra.mxu0 0
  %799 = vmatprep.subr.bf16.mxu0 0
  %800 = vmatpush2.bf16.msra.mxu0 0
  %801 = vmatprep.subr.bf16.mxu0 0
  %802 = vmatpush2.bf16.msra.mxu0 0
  %803 = vmatprep.subr.bf16.mxu0 0
  %804 = vmatpush2.bf16.msra.mxu0 0
  %805 = vmatprep.subr.bf16.mxu0 0
  %806 = vmatpush2.bf16.msra.mxu0 0
  %807 = vmatprep.subr.bf16.mxu0 0
  %808 = vmatpush2.bf16.msra.mxu0 0
  %809 = vmatprep.subr.bf16.mxu0 0
  %810 = vmatpush2.bf16.msra.mxu0 0
  %811 = vmatprep.subr.bf16.mxu0 0
  %812 = vmatpush2.bf16.msra.mxu0 0
  %813 = vmatprep.mubr.bf16.mxu0 0
  %814 = vmatmul.mubr.bf16.gmra.mxu0 %v420
  %v815 = vpop.f32.mrf.mxu0
  %v816 = vadd.f32 0.0, %v815
  %v817 = vpop.f32.mrf.mxu0
  %v818 = vpop.f32.mrf.mxu0
  %v819 = vadd.f32 0.0, %v818
  %v820 = vpop.f32.mrf.mxu0
  %821 = vmatprep.mubr.bf16.mxu0 0
  %822 = vmatmul.mubr.bf16.gmra.mxu0 %v421
  %v823 = vpop.f32.mrf.mxu0
  %v824 = vadd.f32 0.0, %v823
  %v825 = vpop.f32.mrf.mxu0
  %v826 = vpop.f32.mrf.mxu0
  %v827 = vadd.f32 0.0, %v826
  %v828 = vpop.f32.mrf.mxu0
  %829 = vmatprep.mubr.bf16.mxu0 0
  %830 = vmatmul.mubr.bf16.gmra.mxu0 %v422
  %v831 = vpop.f32.mrf.mxu0
  %v832 = vadd.f32 0.0, %v831
  %v833 = vpop.f32.mrf.mxu0
  %v834 = vpop.f32.mrf.mxu0
  %v835 = vadd.f32 0.0, %v834
  %v836 = vpop.f32.mrf.mxu0
  %837 = vmatprep.mubr.bf16.mxu0 0
  %838 = vmatmul.mubr.bf16.gmra.mxu0 %v423
  %v839 = vpop.f32.mrf.mxu0
  %v840 = vadd.f32 0.0, %v839
  %v841 = vpop.f32.mrf.mxu0
  %v842 = vpop.f32.mrf.mxu0
  %v843 = vadd.f32 0.0, %v842
  %v844 = vpop.f32.mrf.mxu0
  %845 = vmatprep.mubr.bf16.mxu0 0
  %846 = vmatmul.mubr.bf16.gmra.mxu0 %v424
  %v847 = vpop.f32.mrf.mxu0
  %v848 = vadd.f32 0.0, %v847
  %v849 = vpop.f32.mrf.mxu0
  %v850 = vpop.f32.mrf.mxu0
  %v851 = vadd.f32 0.0, %v850
  %v852 = vpop.f32.mrf.mxu0
  %853 = vmatprep.mubr.bf16.mxu0 0
  %854 = vmatmul.mubr.bf16.gmra.mxu0 %v425
  %v855 = vpop.f32.mrf.mxu0
  %v856 = vadd.f32 0.0, %v855
  %v857 = vpop.f32.mrf.mxu0
  %v858 = vpop.f32.mrf.mxu0
  %v859 = vadd.f32 0.0, %v858
  %v860 = vpop.f32.mrf.mxu0
  %861 = vmatprep.mubr.bf16.mxu0 0
  %862 = vmatmul.mubr.bf16.gmra.mxu0 %v426
  %v863 = vpop.f32.mrf.mxu0
  %v864 = vadd.f32 0.0, %v863
  %v865 = vpop.f32.mrf.mxu0
  %v866 = vpop.f32.mrf.mxu0
  %v867 = vadd.f32 0.0, %v866
  %v868 = vpop.f32.mrf.mxu0
  %869 = vmatprep.mubr.bf16.mxu0 0
  %870 = vmatmul.mubr.bf16.gmra.mxu0 %v427
  %v871 = vpop.f32.mrf.mxu0
  %v872 = vadd.f32 0.0, %v871
  %v873 = vpop.f32.mrf.mxu0
  %v874 = vpop.f32.mrf.mxu0
  %v875 = vadd.f32 0.0, %v874
  %v876 = vpop.f32.mrf.mxu0
  %877 = vdwg.mxu0
  %v878 = vmul.f32 %v287, %v816
  %v879 = vmul.f32 %v292, %v819
  %v880 = vmul.f32 %v297, %v824
  %v881 = vmul.f32 %v302, %v827
  %v882 = vmul.f32 %v307, %v832
  %v883 = vmul.f32 %v312, %v835
  %v884 = vmul.f32 %v317, %v840
  %v885 = vmul.f32 %v322, %v843
  %v886 = vmul.f32 %v327, %v848
  %v887 = vmul.f32 %v332, %v851
  %v888 = vmul.f32 %v337, %v856
  %v889 = vmul.f32 %v342, %v859
  %v890 = vmul.f32 %v347, %v864
  %v891 = vmul.f32 %v352, %v867
  %v892 = vmul.f32 %v357, %v872
  %v893 = vmul.f32 %v362, %v875
  %v894 = vld [vmem:[%s6] sm:$0x1]
  %v896 = vlaneseq
  %v897 = vshrl.u32 %v896, 7
  %v898 = vsub.s32 0, %v897
  %v899 = vrot.slane %v894, %v898
  %v901 = vadd.f32 %v878, %v899
  %v902 = vadd.f32 %v879, %v899
  %v903 = vadd.f32 %v880, %v899
  %v904 = vadd.f32 %v881, %v899
  %v905 = vadd.f32 %v882, %v899
  %v906 = vadd.f32 %v883, %v899
  %v907 = vadd.f32 %v884, %v899
  %v908 = vadd.f32 %v885, %v899
  %v909 = vadd.f32 %v886, %v899
  %v910 = vadd.f32 %v887, %v899
  %v911 = vadd.f32 %v888, %v899
  %v912 = vadd.f32 %v889, %v899
  %v913 = vadd.f32 %v890, %v899
  %v914 = vadd.f32 %v891, %v899
  %v915 = vadd.f32 %v892, %v899
  %v916 = vadd.f32 %v893, %v899
  %917 = vst [vmem:[%s7] sm:$0xff] %v901
  %918 = vst [vmem:[%s7 + $0x8] sm:$0xff] %v902
  %919 = vst [vmem:[%s7 + $0x10] sm:$0xff] %v903
  %920 = vst [vmem:[%s7 + $0x18] sm:$0xff] %v904
  %921 = vst [vmem:[%s7 + $0x20] sm:$0xff] %v905
  %922 = vst [vmem:[%s7 + $0x28] sm:$0xff] %v906
  %923 = vst [vmem:[%s7 + $0x30] sm:$0xff] %v907
  %924 = vst [vmem:[%s7 + $0x38] sm:$0xff] %v908
  %925 = vst [vmem:[%s7 + $0x40] sm:$0xff] %v909
  %926 = vst [vmem:[%s7 + $0x48] sm:$0xff] %v910
  %927 = vst [vmem:[%s7 + $0x50] sm:$0xff] %v911
  %928 = vst [vmem:[%s7 + $0x58] sm:$0xff] %v912
  %929 = vst [vmem:[%s7 + $0x60] sm:$0xff] %v913
  %930 = vst [vmem:[%s7 + $0x68] sm:$0xff] %v914
  %931 = vst [vmem:[%s7 + $0x70] sm:$0xff] %v915
  %932 = vst [vmem:[%s7 + $0x78] sm:$0xff] %v916
  // Predicated region
  $region30: #{gcn_gnnguard_forward.1} parent=0 // pred_check
    _
  $region31: #{gcn_gnnguard_forward.1} parent=0 // pred_check_branch
    %934 = sbr.rel (0) target = $region33
  $region32: #{gcn_gnnguard_forward.1} parent=0 // pred_region
    _
  $region33: #{gcn_gnnguard_forward.1} parent=0 // pred_fallthru
    _
  // Predicated region
  $region34: #{gcn_gnnguard_forward.1} parent=0 // pred_check
    _
  $region35: #{gcn_gnnguard_forward.1} parent=0 // pred_check_branch
    %936 = sbr.rel (0) target = $region37
  $region36: #{gcn_gnnguard_forward.1} parent=0 // pred_region
    _
  $region37: #{gcn_gnnguard_forward.1} parent=0 // pred_fallthru
    _

</llo_original>
